<compile_context>
chip_gen: v6e
topology: v6e:2x2x1
jax: 0.10.0
libtpu: 0.0.40
codegen_flags: <defaults>
</compile_context>

<pallas_src>
import jax
import jax.numpy as jnp
from jax import lax
from jax.experimental import pallas as pl
from jax.experimental.pallas import tpu as pltpu
import numpy as np


def _postprocess_kernel(obj_logits_ref,   # VMEM (bb, Q, C1)   native dtype
                        verb_logits_ref,  # VMEM (bb, Q, V)    native dtype
                        boxes_ref,        # VMEM (bb, Q, 8)    [sub cxcywh | obj cxcywh]
                        scale_ref,        # VMEM (bb, 1, 2)    f32 [w, h]
                        packed_ref):      # VMEM (bb, Q, V+10) f32 (layout in header)
    f32 = jnp.float32
    V = verb_logits_ref.shape[-1]

    # ---- object scores / labels (no full softmax materialized) -------------
    logits = obj_logits_ref[...].astype(f32)                       # (bb, Q, C1)
    num_fg = logits.shape[-1] - 1                                  # drop no-object class

    col = lax.broadcasted_iota(jnp.int32, logits.shape, 2)
    fg_mask = col < num_fg                                         # mask, not a lane slice

    row_max = jnp.max(logits, axis=-1, keepdims=True)              # stabilizer (all classes)
    denom = jnp.sum(jnp.exp(logits - row_max), axis=-1, keepdims=True)

    fg_logits = jnp.where(fg_mask, logits, -jnp.inf)
    fg_max = jnp.max(fg_logits, axis=-1, keepdims=True)            # (bb, Q, 1)
    # first-argmax over raw fg logits (softmax monotone per row -> same label/tie-break)
    labels = jnp.min(jnp.where(fg_logits >= fg_max, col, num_fg),
                     axis=-1, keepdims=True)                       # (bb, Q, 1) int32
    # max fg softmax prob == exp(fg_max - row_max) / denom : exact (bb,Q,1) divide
    scores = jnp.exp(fg_max - row_max) / denom                     # (bb, Q, 1)

    # ---- verb scores: sigmoid(verb_logits) * obj_scores (lane-aligned at 0) -
    verb = jax.nn.sigmoid(verb_logits_ref[...].astype(f32))        # (bb, Q, V)
    packed_ref[:, :, 0:V] = verb * scores

    # ---- score / label lanes ------------------------------------------------
    packed_ref[:, :, V:V + 1] = scores
    packed_ref[:, :, V + 1:V + 2] = labels.astype(f32)

    # ---- boxes: fused cxcywh -> xyxy, scaled by [w, h]; direct sub-range stores
    box = boxes_ref[...].astype(f32)                               # (bb, Q, 8)
    scale = scale_ref[...]                                         # (bb, 1, 2) f32
    c_s, wh_s = box[:, :, 0:2], box[:, :, 2:4]
    c_o, wh_o = box[:, :, 4:6], box[:, :, 6:8]
    packed_ref[:, :, V + 2:V + 4] = (c_s - 0.5 * wh_s) * scale     # sub x0, y0
    packed_ref[:, :, V + 4:V + 6] = (c_s + 0.5 * wh_s) * scale     # sub x1, y1
    packed_ref[:, :, V + 6:V + 8] = (c_o - 0.5 * wh_o) * scale     # obj x0, y0
    packed_ref[:, :, V + 8:V + 10] = (c_o + 0.5 * wh_o) * scale    # obj x1, y1


def _pick_block_b(B, cap):
    bb = max(1, min(B, cap))
    while B % bb:
        bb -= 1
    return bb


def postprocess_hoi_pallas(pred_obj_logits, pred_verb_logits,
                           pred_sub_boxes, pred_obj_boxes, target_sizes,
                           *, max_block_b=8):
    B, Q, C1 = pred_obj_logits.shape
    V = pred_verb_logits.shape[-1]
    f32 = jnp.float32

    # fuse the two 4-lane box inputs into one (B, Q, 8) operand (one DMA)
    boxes8 = jnp.concatenate([pred_sub_boxes, pred_obj_boxes], axis=-1)

    # per-batch [w, h] scale, shaped (B, 1, 2) to broadcast over (B, Q, 2) box halves
    ts = target_sizes.astype(f32)
    img_h, img_w = ts[:, 0], ts[:, 1]
    scale2 = jnp.stack([img_w, img_h], axis=-1)[:, None, :]        # (B, 1, 2)

    bb = _pick_block_b(B, max_block_b)
    grid = (B // bb,)

    bytes_in = int(pred_obj_logits.size * pred_obj_logits.dtype.itemsize
                   + pred_verb_logits.size * pred_verb_logits.dtype.itemsize
                   + boxes8.size * boxes8.dtype.itemsize
                   + scale2.size * 4)
    bytes_out = int(B * Q * (V + 10) * 4)
    cost = pl.CostEstimate(flops=int(B * Q * (4 * C1 + 2 * V + 32)),
                           transcendentals=int(B * Q * (C1 + V)),
                           bytes_accessed=bytes_in + bytes_out)

    packed = pl.pallas_call(
        _postprocess_kernel,
        out_shape=jax.ShapeDtypeStruct((B, Q, V + 10), f32),
        grid=grid,
        in_specs=[pl.BlockSpec((bb, Q, C1), lambda i: (i, 0, 0)),
                  pl.BlockSpec((bb, Q, V), lambda i: (i, 0, 0)),
                  pl.BlockSpec((bb, Q, 8), lambda i: (i, 0, 0)),
                  pl.BlockSpec((bb, 1, 2), lambda i: (i, 0, 0))],
        out_specs=pl.BlockSpec((bb, Q, V + 10), lambda i: (i, 0, 0)),
        compiler_params=pltpu.CompilerParams(dimension_semantics=("parallel",)),
        cost_estimate=cost,
    )(pred_obj_logits, pred_verb_logits, boxes8, scale2)

    verb_scores = packed[..., 0:V]
    obj_scores = packed[..., V]
    obj_labels = packed[..., V + 1].astype(jnp.int32)   # exact: labels < 2^24
    sub_boxes = packed[..., V + 2:V + 6]
    obj_boxes = packed[..., V + 6:V + 10]
    return obj_scores, obj_labels, verb_scores, sub_boxes, obj_boxes


def postprocess_hoi(outputs, target_sizes, subject_category_id=0):
    """Mirror of PostProcessHOI.forward (binary=False, pnms=-1, aux_outputs=False)."""
    obj_scores, obj_labels, verb_scores, sub_boxes, obj_boxes = postprocess_hoi_pallas(
        outputs['pred_obj_logits'], outputs['pred_verb_logits'],
        outputs['pred_sub_boxes'], outputs['pred_obj_boxes'], target_sizes)

    B, Q = obj_scores.shape
    # Batched assembly (2 device concats total, not O(B) tiny launches), then one host pull.
    sub_labels = jnp.full((B, Q), subject_category_id, obj_labels.dtype)
    labels_all = jnp.concatenate([sub_labels, obj_labels], axis=1)   # (B, 2Q)
    boxes_all = jnp.concatenate([sub_boxes, obj_boxes], axis=1)      # (B, 2Q, 4)

    (obj_scores_h, labels_h, boxes_h, verb_scores_h, verb_logits_h) = jax.device_get(
        (obj_scores, labels_all, boxes_all, verb_scores, outputs['pred_verb_logits']))

    ids = np.arange(2 * Q)
    results = []
    for idx in range(B):
        results.append({
            'labels': labels_h[idx],
            'boxes': boxes_h[idx],
            'verb_scores': verb_scores_h[idx],    # already scaled by obj score in-kernel
            'verb_logits': verb_logits_h[idx],
            'sub_ids': ids[:Q],
            'obj_ids': ids[Q:],
            'obj_scores': obj_scores_h[idx],
        })
    return results


# ------------------------- pure-JAX reference for checking ------------------
def _reference(obj_logits, verb_logits, sub_boxes, obj_boxes, target_sizes):
    prob = jax.nn.softmax(obj_logits.astype(jnp.float32), -1)
    scores = prob[..., :-1].max(-1)
    labels = prob[..., :-1].argmax(-1).astype(jnp.int32)
    verb = jax.nn.sigmoid(verb_logits.astype(jnp.float32)) * scores[..., None]
    h, w = target_sizes[:, 0], target_sizes[:, 1]
    scale = jnp.stack([w, h, w, h], axis=1)[:, None, :]

    def cxcywh_to_xyxy(b):
        b = b.astype(jnp.float32)
        c, wh = b[..., :2], b[..., 2:]
        return jnp.concatenate([c - 0.5 * wh, c + 0.5 * wh], -1)

    return (scores, labels, verb,
            cxcywh_to_xyxy(sub_boxes) * scale,
            cxcywh_to_xyxy(obj_boxes) * scale)


if __name__ == "__main__":
    key = jax.random.PRNGKey(0)
    B, Q, C1, V = 2, 8, 12, 16          # batch, queries, obj classes (+1 no-object), verbs
    k1, k2, k3, k4 = jax.random.split(key, 4)

    outputs = {
        'pred_obj_logits':  jax.random.normal(k1, (B, Q, C1), jnp.float32),
        'pred_verb_logits': jax.random.normal(k2, (B, Q, V), jnp.float32),
        'pred_sub_boxes':   jax.random.uniform(k3, (B, Q, 4), jnp.float32, 0.1, 0.9),
        'pred_obj_boxes':   jax.random.uniform(k4, (B, Q, 4), jnp.float32, 0.1, 0.9),
    }
    target_sizes = jnp.array([[480.0, 640.0], [375.0, 500.0]], jnp.float32)  # (h, w)

    results = postprocess_hoi(outputs, target_sizes, subject_category_id=0)
    jax.block_until_ready(outputs['pred_verb_logits'])

    # sanity check against pure-JAX reference (f32 inputs)
    r_sc, r_lb, r_vs, r_sb, r_ob = _reference(
        outputs['pred_obj_logits'], outputs['pred_verb_logits'],
        outputs['pred_sub_boxes'], outputs['pred_obj_boxes'], target_sizes)
    k_sc, k_lb, k_vs, k_sb, k_ob = postprocess_hoi_pallas(
        outputs['pred_obj_logits'], outputs['pred_verb_logits'],
        outputs['pred_sub_boxes'], outputs['pred_obj_boxes'], target_sizes)
    jax.block_until_ready((k_sc, k_lb, k_vs, k_sb, k_ob))
    assert np.allclose(np.asarray(k_sc), np.asarray(r_sc), atol=1e-5)
    assert np.array_equal(np.asarray(k_lb), np.asarray(r_lb))
    assert np.allclose(np.asarray(k_vs), np.asarray(r_vs), atol=1e-5)
    assert np.allclose(np.asarray(k_sb), np.asarray(r_sb), atol=1e-4)
    assert np.allclose(np.asarray(k_ob), np.asarray(r_ob), atol=1e-4)

    # bf16 inputs also accepted with no wrapper-side cast; compare against a reference
    # driven by the SAME bf16 inputs (both paths upcast to f32 in-kernel/in-reference),
    # so tolerances stay tight and a real box-path regression would be visible.
    bf16_outputs = {k: v.astype(jnp.bfloat16) for k, v in outputs.items()}
    rb_sc, rb_lb, rb_vs, rb_sb, rb_ob = _reference(
        bf16_outputs['pred_obj_logits'], bf16_outputs['pred_verb_logits'],
        bf16_outputs['pred_sub_boxes'], bf16_outputs['pred_obj_boxes'], target_sizes)
    b_sc, b_lb, b_vs, b_sb, b_ob = postprocess_hoi_pallas(
        bf16_outputs['pred_obj_logits'], bf16_outputs['pred_verb_logits'],
        bf16_outputs['pred_sub_boxes'], bf16_outputs['pred_obj_boxes'], target_sizes)
    jax.block_until_ready((b_sc, b_lb, b_vs, b_sb, b_ob))
    assert np.allclose(np.asarray(b_sc), np.asarray(rb_sc), atol=1e-5)
    assert np.array_equal(np.asarray(b_lb), np.asarray(rb_lb))
    assert np.allclose(np.asarray(b_vs), np.asarray(rb_vs), atol=1e-5)
    assert np.allclose(np.asarray(b_sb), np.asarray(rb_sb), atol=1e-3)
    assert np.allclose(np.asarray(b_ob), np.asarray(rb_ob), atol=1e-3)

    print("KERNEL_OK")
</pallas_src>

<mosaic_0001>
module attributes {stable_mosaic.version = 11 : i64} {
  func.func @_postprocess_kernel(%arg0: i32, %arg1: memref<2x8x12xf32, #tpu.memory_space<vmem>>, %arg2: memref<2x8x16xf32, #tpu.memory_space<vmem>>, %arg3: memref<2x8x8xf32, #tpu.memory_space<vmem>>, %arg4: memref<2x1x2xf32, #tpu.memory_space<vmem>>, %arg5: memref<2x8x26xf32, #tpu.memory_space<vmem>>) attributes {dimension_semantics = [#tpu.dimension_semantics<parallel>], iteration_bounds = array<i64: 1>, scalar_prefetch = 0 : i64, scratch_operands = 0 : i64, tpu.core_type = #tpu.core_type<tc>, window_params = [{transform_indices = @transform_0, window_bounds = array<i64: 2, 8, 12>}, {transform_indices = @transform_1, window_bounds = array<i64: 2, 8, 16>}, {transform_indices = @transform_2, window_bounds = array<i64: 2, 8, 8>}, {transform_indices = @transform_3, window_bounds = array<i64: 2, 1, 2>}, {transform_indices = @transform_4, window_bounds = array<i64: 2, 8, 26>}]} {
    %c0 = arith.constant 0 : index
    %c0_0 = arith.constant 0 : index
    %c0_1 = arith.constant 0 : index
    %0 = vector.load %arg1[%c0, %c0_0, %c0_1] : memref<2x8x12xf32, #tpu.memory_space<vmem>>, vector<2x8x12xf32>
    %1 = tpu.iota {dimensions = array<i32: 2>} : vector<2x8x12xi32>
    %c11_i32 = arith.constant 11 : i32
    %2 = vector.broadcast %c11_i32 : i32 to vector<2x8x12xi32>
    %3 = arith.cmpi slt, %1, %2 : vector<2x8x12xi32>
    %cst = arith.constant dense<0xFF800000> : vector<2x8xf32>
    %4 = vector.multi_reduction <maximumf>, %0, %cst [2] : vector<2x8x12xf32> to vector<2x8xf32>
    %5 = vector.shape_cast %4 : vector<2x8xf32> to vector<2x8x1xf32>
    %6 = vector.broadcast %5 : vector<2x8x1xf32> to vector<2x8x12xf32>
    %7 = arith.subf %0, %6 : vector<2x8x12xf32>
    %8 = math.exp %7 : vector<2x8x12xf32>
    %cst_2 = arith.constant dense<0.000000e+00> : vector<2x8xf32>
    %9 = vector.multi_reduction <add>, %8, %cst_2 [2] : vector<2x8x12xf32> to vector<2x8xf32>
    %10 = vector.shape_cast %9 : vector<2x8xf32> to vector<2x8x1xf32>
    %cst_3 = arith.constant 0xFF800000 : f32
    %11 = vector.broadcast %cst_3 : f32 to vector<2x8x12xf32>
    %12 = arith.select %3, %0, %11 : vector<2x8x12xi1>, vector<2x8x12xf32>
    %cst_4 = arith.constant dense<0xFF800000> : vector<2x8xf32>
    %13 = vector.multi_reduction <maximumf>, %12, %cst_4 [2] : vector<2x8x12xf32> to vector<2x8xf32>
    %14 = vector.shape_cast %13 : vector<2x8xf32> to vector<2x8x1xf32>
    %15 = vector.broadcast %14 : vector<2x8x1xf32> to vector<2x8x12xf32>
    %16 = arith.cmpf oge, %12, %15 : vector<2x8x12xf32>
    %c11_i32_5 = arith.constant 11 : i32
    %17 = vector.broadcast %c11_i32_5 : i32 to vector<2x8x12xi32>
    %18 = arith.select %16, %1, %17 : vector<2x8x12xi1>, vector<2x8x12xi32>
    %cst_6 = arith.constant dense<2147483647> : vector<2x8xi32>
    %19 = vector.multi_reduction <minsi>, %18, %cst_6 [2] : vector<2x8x12xi32> to vector<2x8xi32>
    %20 = vector.shape_cast %19 : vector<2x8xi32> to vector<2x8x1xi32>
    %21 = arith.subf %14, %5 : vector<2x8x1xf32>
    %22 = math.exp %21 : vector<2x8x1xf32>
    %23 = arith.divf %22, %10 : vector<2x8x1xf32>
    %c0_7 = arith.constant 0 : index
    %c0_8 = arith.constant 0 : index
    %c0_9 = arith.constant 0 : index
    %24 = vector.load %arg2[%c0_7, %c0_8, %c0_9] : memref<2x8x16xf32, #tpu.memory_space<vmem>>, vector<2x8x16xf32>
    %25 = arith.negf %24 : vector<2x8x16xf32>
    %26 = math.exp %25 : vector<2x8x16xf32>
    %cst_10 = arith.constant 1.000000e+00 : f32
    %27 = vector.broadcast %cst_10 : f32 to vector<2x8x16xf32>
    %28 = arith.addf %27, %26 : vector<2x8x16xf32>
    %29 = arith.divf %27, %28 : vector<2x8x16xf32>
    %30 = vector.broadcast %23 : vector<2x8x1xf32> to vector<2x8x16xf32>
    %31 = arith.mulf %29, %30 : vector<2x8x16xf32>
    %c0_11 = arith.constant 0 : index
    %c0_12 = arith.constant 0 : index
    %c0_13 = arith.constant 0 : index
    %32 = vector.load %arg5[%c0_11, %c0_12, %c0_13] : memref<2x8x26xf32, #tpu.memory_space<vmem>>, vector<2x8x16xf32>
    tpu.vector_store %arg5[%c0_11, %c0_12, %c0_13], %31 {strides = array<i32>} : memref<2x8x26xf32, #tpu.memory_space<vmem>>, vector<2x8x16xf32>,
    %c0_14 = arith.constant 0 : index
    %c0_15 = arith.constant 0 : index
    %c16 = arith.constant 16 : index
    %33 = vector.load %arg5[%c0_14, %c0_15, %c16] : memref<2x8x26xf32, #tpu.memory_space<vmem>>, vector<2x8x1xf32>
    tpu.vector_store %arg5[%c0_14, %c0_15, %c16], %23 {strides = array<i32>} : memref<2x8x26xf32, #tpu.memory_space<vmem>>, vector<2x8x1xf32>,
    %34 = arith.sitofp %20 : vector<2x8x1xi32> to vector<2x8x1xf32>
    %c0_16 = arith.constant 0 : index
    %c0_17 = arith.constant 0 : index
    %c17 = arith.constant 17 : index
    %35 = vector.load %arg5[%c0_16, %c0_17, %c17] : memref<2x8x26xf32, #tpu.memory_space<vmem>>, vector<2x8x1xf32>
    tpu.vector_store %arg5[%c0_16, %c0_17, %c17], %34 {strides = array<i32>} : memref<2x8x26xf32, #tpu.memory_space<vmem>>, vector<2x8x1xf32>,
    %c0_18 = arith.constant 0 : index
    %c0_19 = arith.constant 0 : index
    %c0_20 = arith.constant 0 : index
    %36 = vector.load %arg3[%c0_18, %c0_19, %c0_20] : memref<2x8x8xf32, #tpu.memory_space<vmem>>, vector<2x8x8xf32>
    %c0_21 = arith.constant 0 : index
    %c0_22 = arith.constant 0 : index
    %c0_23 = arith.constant 0 : index
    %37 = vector.load %arg4[%c0_21, %c0_22, %c0_23] : memref<2x1x2xf32, #tpu.memory_space<vmem>>, vector<2x1x2xf32>
    %38 = vector.extract_strided_slice %36 {offsets = [0, 0, 0], sizes = [2, 8, 2], strides = [1, 1, 1]} : vector<2x8x8xf32> to vector<2x8x2xf32>
    %39 = vector.extract_strided_slice %36 {offsets = [0, 0, 2], sizes = [2, 8, 2], strides = [1, 1, 1]} : vector<2x8x8xf32> to vector<2x8x2xf32>
    %40 = vector.extract_strided_slice %36 {offsets = [0, 0, 4], sizes = [2, 8, 2], strides = [1, 1, 1]} : vector<2x8x8xf32> to vector<2x8x2xf32>
    %41 = vector.extract_strided_slice %36 {offsets = [0, 0, 6], sizes = [2, 8, 2], strides = [1, 1, 1]} : vector<2x8x8xf32> to vector<2x8x2xf32>
    %cst_24 = arith.constant 5.000000e-01 : f32
    %42 = vector.broadcast %cst_24 : f32 to vector<2x8x2xf32>
    %43 = arith.mulf %42, %39 : vector<2x8x2xf32>
    %44 = arith.subf %38, %43 : vector<2x8x2xf32>
    %45 = vector.broadcast %37 : vector<2x1x2xf32> to vector<2x8x2xf32>
    %46 = arith.mulf %44, %45 : vector<2x8x2xf32>
    %c0_25 = arith.constant 0 : index
    %c0_26 = arith.constant 0 : index
    %c18 = arith.constant 18 : index
    %47 = vector.load %arg5[%c0_25, %c0_26, %c18] : memref<2x8x26xf32, #tpu.memory_space<vmem>>, vector<2x8x2xf32>
    tpu.vector_store %arg5[%c0_25, %c0_26, %c18], %46 {strides = array<i32>} : memref<2x8x26xf32, #tpu.memory_space<vmem>>, vector<2x8x2xf32>,
    %cst_27 = arith.constant 5.000000e-01 : f32
    %48 = vector.broadcast %cst_27 : f32 to vector<2x8x2xf32>
    %49 = arith.mulf %48, %39 : vector<2x8x2xf32>
    %50 = arith.addf %38, %49 : vector<2x8x2xf32>
    %51 = vector.broadcast %37 : vector<2x1x2xf32> to vector<2x8x2xf32>
    %52 = arith.mulf %50, %51 : vector<2x8x2xf32>
    %c0_28 = arith.constant 0 : index
    %c0_29 = arith.constant 0 : index
    %c20 = arith.constant 20 : index
    %53 = vector.load %arg5[%c0_28, %c0_29, %c20] : memref<2x8x26xf32, #tpu.memory_space<vmem>>, vector<2x8x2xf32>
    tpu.vector_store %arg5[%c0_28, %c0_29, %c20], %52 {strides = array<i32>} : memref<2x8x26xf32, #tpu.memory_space<vmem>>, vector<2x8x2xf32>,
    %cst_30 = arith.constant 5.000000e-01 : f32
    %54 = vector.broadcast %cst_30 : f32 to vector<2x8x2xf32>
    %55 = arith.mulf %54, %41 : vector<2x8x2xf32>
    %56 = arith.subf %40, %55 : vector<2x8x2xf32>
    %57 = vector.broadcast %37 : vector<2x1x2xf32> to vector<2x8x2xf32>
    %58 = arith.mulf %56, %57 : vector<2x8x2xf32>
    %c0_31 = arith.constant 0 : index
    %c0_32 = arith.constant 0 : index
    %c22 = arith.constant 22 : index
    %59 = vector.load %arg5[%c0_31, %c0_32, %c22] : memref<2x8x26xf32, #tpu.memory_space<vmem>>, vector<2x8x2xf32>
    tpu.vector_store %arg5[%c0_31, %c0_32, %c22], %58 {strides = array<i32>} : memref<2x8x26xf32, #tpu.memory_space<vmem>>, vector<2x8x2xf32>,
    %cst_33 = arith.constant 5.000000e-01 : f32
    %60 = vector.broadcast %cst_33 : f32 to vector<2x8x2xf32>
    %61 = arith.mulf %60, %41 : vector<2x8x2xf32>
    %62 = arith.addf %40, %61 : vector<2x8x2xf32>
    %63 = vector.broadcast %37 : vector<2x1x2xf32> to vector<2x8x2xf32>
    %64 = arith.mulf %62, %63 : vector<2x8x2xf32>
    %c0_34 = arith.constant 0 : index
    %c0_35 = arith.constant 0 : index
    %c24 = arith.constant 24 : index
    %65 = vector.load %arg5[%c0_34, %c0_35, %c24] : memref<2x8x26xf32, #tpu.memory_space<vmem>>, vector<2x8x2xf32>
    tpu.vector_store %arg5[%c0_34, %c0_35, %c24], %64 {strides = array<i32>} : memref<2x8x26xf32, #tpu.memory_space<vmem>>, vector<2x8x2xf32>,
    return
  }
  func.func @transform_0(%arg0: i32) -> (i32, i32, i32) {
    %c0_i32 = arith.constant 0 : i32
    %c0_i32_0 = arith.constant 0 : i32
    %c0_i32_1 = arith.constant 0 : i32
    return %arg0, %c0_i32, %c0_i32_0 : i32, i32, i32
  }
  func.func @transform_1(%arg0: i32) -> (i32, i32, i32) {
    %c0_i32 = arith.constant 0 : i32
    %c0_i32_0 = arith.constant 0 : i32
    %c0_i32_1 = arith.constant 0 : i32
    return %arg0, %c0_i32, %c0_i32_0 : i32, i32, i32
  }
  func.func @transform_2(%arg0: i32) -> (i32, i32, i32) {
    %c0_i32 = arith.constant 0 : i32
    %c0_i32_0 = arith.constant 0 : i32
    %c0_i32_1 = arith.constant 0 : i32
    return %arg0, %c0_i32, %c0_i32_0 : i32, i32, i32
  }
  func.func @transform_3(%arg0: i32) -> (i32, i32, i32) {
    %c0_i32 = arith.constant 0 : i32
    %c0_i32_0 = arith.constant 0 : i32
    %c0_i32_1 = arith.constant 0 : i32
    return %arg0, %c0_i32, %c0_i32_0 : i32, i32, i32
  }
  func.func @transform_4(%arg0: i32) -> (i32, i32, i32) {
    %c0_i32 = arith.constant 0 : i32
    %c0_i32_0 = arith.constant 0 : i32
    %c0_i32_1 = arith.constant 0 : i32
    return %arg0, %c0_i32, %c0_i32_0 : i32, i32, i32
  }
}

</mosaic_0001>

<llo_original>
// kernel: tpu_custom_call.1
$region0: #{tpu_custom_call.1}
  #allocation0 [shape = 'u32[]', space=smem, size = 0x4, offset = 0x4, fixed_abs, tag = 'smem constant byte address 0x4 - core index']
  #allocation1 [shape = 'u32[144,128]{1,0:T(1,128)}', space=vmem, size = 0x12000, scoped, tag = 'internal scratch']
  %s0 = inlined_call_operand.hbm [shape: f32[2,8,12], index: 0, kind: input, shape index: {}]
  %s1 = inlined_call_operand.hbm [shape: f32[2,8,16], index: 1, kind: input, shape index: {}]
  %s2 = inlined_call_operand.hbm [shape: f32[2,8,8], index: 2, kind: input, shape index: {}]
  %s3 = inlined_call_operand.vmem [shape: f32[2,1,2], index: 3, kind: input, shape index: {}]
  %s4 = inlined_call_operand.hbm [shape: f32[2,8,26], index: 4, kind: output, shape index: {}]
  %s5 = sld [smem:[#allocation0]]
  $region38: #{tpu_custom_call.1} parent=0
    _
  %s7 = ssub.s32 1, %s5
  %s8 = scalar_select 0, %s7, %s5
  $region1: #{tpu_custom_call.1} parent=0
    #allocation2 [shape = 'u8[8192]{0}', space=vmem, size = 0x2000, scoped, tag = 'input window, operand 0, single buffered']
    #allocation3 [shape = 's32[1]{0}', space=sflag, size = 0x4, scoped, tag = 'scoped memory for tpu_custom_call.1']
    #allocation4 [shape = 's32[1]{0}', space=sflag, size = 0x4, scoped, tag = 'scoped memory for tpu_custom_call.1']
    #allocation5 [shape = 'u8[8192]{0}', space=vmem, size = 0x2000, scoped, tag = 'input window, operand 1, single buffered']
    #allocation6 [shape = 's32[1]{0}', space=sflag, size = 0x4, scoped, tag = 'scoped memory for tpu_custom_call.1']
    #allocation7 [shape = 'u8[8192]{0}', space=vmem, size = 0x2000, scoped, tag = 'input window, operand 2, single buffered']
    #allocation8 [shape = 'u8[8192]{0}', space=vmem, size = 0x2000, scoped, tag = 'output window, operand 0, single buffered']
    %9 = vsyncpa [#allocation3], 0
    %10 = vsyncpa [#allocation6], 0
    %11 = vsyncpa [#allocation4], 0
    // Predicated region
    $region2: #{tpu_custom_call.1} parent=1 // pred_check
      _
    $region3: #{tpu_custom_call.1} parent=1 // pred_check_branch
      %13 = sbr.rel (0) target = $region5
    $region4: #{tpu_custom_call.1} parent=1 // pred_region
      %s15 = ssub.s32 256, 256
      %16 = vsyncadd [#allocation3], %s15
      %s17 = sshll.u32 [#allocation2], 4
      %s18 = int_to_ptr.vmem [resolvable:$true] %s17
      %23 = dma.hbm_to_vmem [thread:$0]  %s0, 256, %s18, [#allocation3], 128, 128, 8
    $region5: #{tpu_custom_call.1} parent=1 // pred_fallthru
      _
    // Predicated region
    $region6: #{tpu_custom_call.1} parent=1 // pred_check
      _
    $region7: #{tpu_custom_call.1} parent=1 // pred_check_branch
      %25 = sbr.rel (0) target = $region9
    $region8: #{tpu_custom_call.1} parent=1 // pred_region
      %s27 = ssub.s32 256, 256
      %28 = vsyncadd [#allocation6], %s27
      %s29 = sshll.u32 [#allocation5], 4
      %s30 = int_to_ptr.vmem [resolvable:$true] %s29
      %35 = dma.hbm_to_vmem [thread:$0]  %s1, 256, %s30, [#allocation6], 128, 128, 8
    $region9: #{tpu_custom_call.1} parent=1 // pred_fallthru
      _
    // Predicated region
    $region10: #{tpu_custom_call.1} parent=1 // pred_check
      _
    $region11: #{tpu_custom_call.1} parent=1 // pred_check_branch
      %37 = sbr.rel (0) target = $region13
    $region12: #{tpu_custom_call.1} parent=1 // pred_region
      %s39 = ssub.s32 256, 256
      %40 = vsyncadd [#allocation6], %s39
      %s41 = sshll.u32 [#allocation7], 4
      %s42 = int_to_ptr.vmem [resolvable:$true] %s41
      %47 = dma.hbm_to_vmem [thread:$0]  %s2, 256, %s42, [#allocation6], 128, 128, 8
    $region13: #{tpu_custom_call.1} parent=1 // pred_fallthru
      _
    // Predicated region
    $region14: #{tpu_custom_call.1} parent=1 // pred_check
      _
    $region15: #{tpu_custom_call.1} parent=1 // pred_check_branch
      %49 = sbr.rel (0) target = $region17
    $region16: #{tpu_custom_call.1} parent=1 // pred_region
      _
    $region17: #{tpu_custom_call.1} parent=1 // pred_fallthru
      _
    // Predicated region
    $region18: #{tpu_custom_call.1} parent=1 // pred_check
      _
    $region19: #{tpu_custom_call.1} parent=1 // pred_check_branch
      %51 = sbr.rel (0) target = $region21
    $region20: #{tpu_custom_call.1} parent=1 // pred_region
      %52 = dma.done [#allocation3], 256
    $region21: #{tpu_custom_call.1} parent=1 // pred_fallthru
      _
    // Predicated region
    $region22: #{tpu_custom_call.1} parent=1 // pred_check
      _
    $region23: #{tpu_custom_call.1} parent=1 // pred_check_branch
      %54 = sbr.rel (0) target = $region25
    $region24: #{tpu_custom_call.1} parent=1 // pred_region
      %55 = dma.done [#allocation6], 256
    $region25: #{tpu_custom_call.1} parent=1 // pred_fallthru
      _
    // Predicated region
    $region26: #{tpu_custom_call.1} parent=1 // pred_check
      _
    $region27: #{tpu_custom_call.1} parent=1 // pred_check_branch
      %57 = sbr.rel (0) target = $region29
    $region28: #{tpu_custom_call.1} parent=1 // pred_region
      %58 = dma.done [#allocation6], 256
    $region29: #{tpu_custom_call.1} parent=1 // pred_fallthru
      _
    %v59 = vld [vmem:[#allocation2] sm:$0xff]
    %v60 = vld [vmem:[#allocation2 + $0x8] sm:$0xff]
    %v61 = vlaneseq
    %v62 = vand.u32 %v61, 127
    %vm63 = vcmp.lt.s32.totalorder %v62, 11
    %vm64 = vcmask 97280
    %v65 = vsel %vm64, %v59, -inf
    %66 = vmax.xlane.f32.xlu0 %v65
    %v67 = vpop.xlane.xlu0 %66
    %v68 = vsel %vm64, %v60, -inf
    %69 = vmax.xlane.f32.xlu0 %v68
    %v70 = vpop.xlane.xlu0 %69
    %v71 = vsub.f32 %v59, %v67
    %v72 = vsub.f32 %v60, %v70
    %v73 = vmul.f32 %v71, 1.442695
    %v74 = vpow.pop %v73
    %v75 = vmul.f32 %v72, 1.442695
    %v76 = vpow.pop %v75
    %v77 = vsel %vm64, %v74, 0.0
    %78 = vadd.xlane.f32.xlu0 %v77
    %v79 = vpop.xlane.xlu0 %78
    %v80 = vsel %vm64, %v76, 0.0
    %81 = vadd.xlane.f32.xlu0 %v80
    %v82 = vpop.xlane.xlu0 %81
    %v83 = vsel %vm63, %v59, -inf
    %v84 = vsel %vm63, %v60, -inf
    %v85 = vsel %vm64, %v83, -inf
    %86 = vmax.xlane.f32.xlu0 %v85
    %v87 = vpop.xlane.xlu0 %86
    %v88 = vsel %vm64, %v84, -inf
    %89 = vmax.xlane.f32.xlu0 %v88
    %v90 = vpop.xlane.xlu0 %89
    %vm91 = vcmp.ge.f32.partialorder %v83, %v87
    %vm92 = vcmp.ge.f32.partialorder %v84, %v90
    %v93 = vsel %vm91, %v62, 11
    %v94 = vsel %vm92, %v62, 11
    %v95 = vsel %vm64, %v93, 2147483647
    %v96 = vand.u32 %v95, 65535
    %v97 = vshra.s32 %v95, 16
    %v98 = vcvt.s32.f32 %v96
    %v99 = vcvt.s32.f32 %v97
    %100 = vmin.xlane.f32.xlu0 %v99
    %v101 = vpop.xlane.xlu0 %100
    %vm102 = vcmp.eq.f32.partialorder %v99, %v101
    %v103 = vsel %vm102, %v98, inf
    %104 = vmin.xlane.f32.xlu0 %v103
    %v105 = vpop.xlane.xlu0 %104
    %v106 = vcvt.f32.s32 %v105
    %v107 = vcvt.f32.s32 %v101
    %v108 = vshll.u32 %v107, 16
    %v109 = vadd.s32 %v108, %v106
    %v110 = vsel %vm64, %v94, 2147483647
    %v111 = vand.u32 %v110, 65535
    %v112 = vshra.s32 %v110, 16
    %v113 = vcvt.s32.f32 %v111
    %v114 = vcvt.s32.f32 %v112
    %115 = vmin.xlane.f32.xlu0 %v114
    %v116 = vpop.xlane.xlu0 %115
    %vm117 = vcmp.eq.f32.partialorder %v114, %v116
    %v118 = vsel %vm117, %v113, inf
    %119 = vmin.xlane.f32.xlu0 %v118
    %v120 = vpop.xlane.xlu0 %119
    %v121 = vcvt.f32.s32 %v120
    %v122 = vcvt.f32.s32 %v116
    %v123 = vshll.u32 %v122, 16
    %v124 = vadd.s32 %v123, %v121
    %v125 = vsub.f32 %v87, %v67
    %v126 = vsub.f32 %v90, %v70
    %v127 = vmul.f32 %v125, 1.442695
    %v128 = vpow.pop %v127
    %v129 = vmul.f32 %v126, 1.442695
    %v130 = vpow.pop %v129
    %v131 = vrcp.pop %v79
    %v132 = vmul.f32 %v128, %v131
    %v133 = vrcp.pop %v82
    %v134 = vmul.f32 %v130, %v133
    %v135 = vld [vmem:[#allocation5] sm:$0xff]
    %v136 = vld [vmem:[#allocation5 + $0x8] sm:$0xff]
    %v137 = vxor.u32 %v135, 2147483648
    %v138 = vxor.u32 %v136, 2147483648
    %v139 = vmul.f32 %v137, 1.442695
    %v140 = vpow.pop %v139
    %v141 = vmul.f32 %v138, 1.442695
    %v142 = vpow.pop %v141
    %v143 = vadd.f32 %v140, 1.0
    %v144 = vadd.f32 %v142, 1.0
    %v145 = vrcp.pop %v143
    %v146 = vmul.f32 1.0, %v145
    %v147 = vrcp.pop %v144
    %v148 = vmul.f32 1.0, %v147
    %v149 = vmul.f32 %v146, %v132
    %v150 = vmul.f32 %v148, %v134
    %vm151 = vcmask 130048
    %152 = vst.msk [vmem:[#allocation8] sm:$0xff] %vm151, %v149
    %153 = vst.msk [vmem:[#allocation8 + $0x8] sm:$0xff] %vm151, %v150
    %vm154 = vcmask 138368
    %155 = vst.msk [vmem:[#allocation8] sm:$0xff] %vm154, %v132
    %156 = vst.msk [vmem:[#allocation8 + $0x8] sm:$0xff] %vm154, %v134
    %v157 = vcvt.s32.f32 %v109
    %v158 = vcvt.s32.f32 %v124
    %vm159 = vcmask 146568
    %160 = vst.msk [vmem:[#allocation8] sm:$0xff] %vm159, %v157
    %161 = vst.msk [vmem:[#allocation8 + $0x8] sm:$0xff] %vm159, %v158
    %v162 = vld [vmem:[#allocation7] sm:$0xff]
    %v163 = vld [vmem:[#allocation7 + $0x8] sm:$0xff]
    %v164 = vld [vmem:[%s3] sm:$0x1]
    %v165 = vld [vmem:[%s3 + $0x1] sm:$0x1]
    %v166 = vmul.f32 %v162, 0.5
    %v167 = vmul.f32 %v163, 0.5
    %170 = vrot.lane.b32.xlu0 %v166, 126
    %v171 = vpop.permute.xlu0 %170
    %172 = vrot.lane.b32.xlu0 %v167, 126
    %v173 = vpop.permute.xlu0 %172
    %v176 = vsub.f32 %v162, %v171
    %v177 = vsub.f32 %v163, %v173
    %v180 = vlaneseq
    %v181 = vshrl.u32 %v180, 7
    %v182 = vsub.s32 0, %v181
    %v183 = vrot.slane %v164, %v182
    %v184 = vlaneseq
    %v185 = vshrl.u32 %v184, 7
    %v186 = vsub.s32 0, %v185
    %v187 = vrot.slane %v165, %v186
    %v190 = vmul.f32 %v176, %v183
    %v191 = vmul.f32 %v177, %v187
    %194 = vrot.lane.b32.xlu0 %v190, 18
    %v195 = vpop.permute.xlu0 %194
    %196 = vrot.lane.b32.xlu0 %v191, 18
    %v197 = vpop.permute.xlu0 %196
    %vm200 = vcmask 162960
    %201 = vst.msk [vmem:[#allocation8] sm:$0xff] %vm200, %v195
    %202 = vst.msk [vmem:[#allocation8 + $0x8] sm:$0xff] %vm200, %v197
    %v203 = vadd.f32 %v162, %v171
    %v204 = vadd.f32 %v163, %v173
    %v205 = vmul.f32 %v203, %v183
    %v206 = vmul.f32 %v204, %v187
    %209 = vrot.lane.b32.xlu0 %v205, 20
    %v210 = vpop.permute.xlu0 %209
    %211 = vrot.lane.b32.xlu0 %v206, 20
    %v212 = vpop.permute.xlu0 %211
    %vm215 = vcmask 179360
    %216 = vst.msk [vmem:[#allocation8] sm:$0xff] %vm215, %v210
    %217 = vst.msk [vmem:[#allocation8 + $0x8] sm:$0xff] %vm215, %v212
    %218 = vrot.lane.b32.xlu0 %v183, 4
    %v219 = vpop.permute.xlu0 %218
    %220 = vrot.lane.b32.xlu0 %v187, 4
    %v221 = vpop.permute.xlu0 %220
    %v224 = vmul.f32 %v176, %v219
    %v225 = vmul.f32 %v177, %v221
    %228 = vrot.lane.b32.xlu0 %v224, 18
    %v229 = vpop.permute.xlu0 %228
    %230 = vrot.lane.b32.xlu0 %v225, 18
    %v231 = vpop.permute.xlu0 %230
    %vm234 = vcmask 195760
    %235 = vst.msk [vmem:[#allocation8] sm:$0xff] %vm234, %v229
    %236 = vst.msk [vmem:[#allocation8 + $0x8] sm:$0xff] %vm234, %v231
    %v237 = vmul.f32 %v203, %v219
    %v238 = vmul.f32 %v204, %v221
    %241 = vrot.lane.b32.xlu0 %v237, 20
    %v242 = vpop.permute.xlu0 %241
    %243 = vrot.lane.b32.xlu0 %v238, 20
    %v244 = vpop.permute.xlu0 %243
    %vm247 = vcmask 212160
    %248 = vst.msk [vmem:[#allocation8] sm:$0xff] %vm247, %v242
    %249 = vst.msk [vmem:[#allocation8 + $0x8] sm:$0xff] %vm247, %v244
    // Predicated region
    $region30: #{tpu_custom_call.1} parent=1 // pred_check
      _
    $region31: #{tpu_custom_call.1} parent=1 // pred_check_branch
      %251 = sbr.rel (0) target = $region33
    $region32: #{tpu_custom_call.1} parent=1 // pred_region
      %s253 = ssub.s32 256, 256
      %254 = vsyncadd [#allocation4], %s253
      %s255 = sshll.u32 [#allocation8], 4
      %s256 = int_to_ptr.vmem [resolvable:$true] %s255
      %261 = dma.vmem_to_hbm [thread:$0]  %s256, 256, %s4, [#allocation4], 128, 128, 8
    $region33: #{tpu_custom_call.1} parent=1 // pred_fallthru
      _
    // Predicated region
    $region34: #{tpu_custom_call.1} parent=1 // pred_check
      _
    $region35: #{tpu_custom_call.1} parent=1 // pred_check_branch
      %263 = sbr.rel (0) target = $region37
    $region36: #{tpu_custom_call.1} parent=1 // pred_region
      %264 = dma.done [#allocation4], 256
    $region37: #{tpu_custom_call.1} parent=1 // pred_fallthru
      _
    %265 = vsyncpa [#allocation3], 1
    %266 = vsyncpa [#allocation6], 1
    %267 = vsyncpa [#allocation4], 1

</llo_original>
